<compile_context>
chip_gen: v7x
topology: tpu7x:2x2x1
jax: 0.10.0
libtpu: 0.0.40
codegen_flags: <defaults>
</compile_context>

<pallas_src>
import functools

import jax
import jax.numpy as jnp
from jax import lax
from jax.experimental import pallas as pl
from jax.experimental.pallas import tpu as pltpu

# torchvision rgb_to_grayscale weights (ITU-R 601-2)
_RW, _GW, _BW = 0.2989, 0.587, 0.114

_LANE = 128
_MAX_CHUNK_IMGS = 8                       # vectorized sub-chunk (keeps intermediates small)
_CHUNK_SCRATCH_BUDGET = 6 * 1024 * 1024   # VMEM allowance for live per-chunk intermediates
_MAX_UNROLL = 8


def _round_up(x, m):
    return -(-x // m) * m


def _sublane_tile(itemsize):
    # f32 -> 8 sublanes, bf16/f16 -> 16, int8/u8 -> 32 (packed along sublanes).
    return {4: 8, 2: 16, 1: 32}.get(int(itemsize), 8)


def _vmem_capacity_bytes():
    try:
        return int(pltpu.get_tpu_info().vmem_capacity_bytes)
    except Exception:
        return 64 * 1024 * 1024  # conservative fallback (v7x per-TC size)


def _sharp_partial_kernel(fake_ref, real_ref, fsum_ref, rsum_ref, *,
                          n_total, block_imgs, chunk, mask_images):
    # fake_ref / real_ref : (block_imgs, 3, H, W) VMEM tiles in native input dtype.
    # fsum_ref / rsum_ref : (1, 1, 1) per-block partial sums (one write per step).
    _, _, H, W = fake_ref.shape

    # Validity of the 3x3 'valid' convolution region, fused as a 0/1 multiply.
    # Direct comparisons (VPU only) instead of the former roll-derived mask.
    row = lax.broadcasted_iota(jnp.int32, (H, W), 0)
    col = lax.broadcasted_iota(jnp.int32, (H, W), 1)
    spatial_w = ((row < H - 2) & (col < W - 2)).astype(jnp.float32)   # (H, W)

    base_img = pl.program_id(0) * block_imgs

    def sobel_mag_sum(img_chunk, weights):
        # img_chunk: (chunk, 3, H, W); weights broadcastable to (chunk, H, W).
        r = img_chunk[:, 0].astype(jnp.float32)
        g = img_chunk[:, 1].astype(jnp.float32)
        b = img_chunk[:, 2].astype(jnp.float32)
        gray = _RW * r + _GW * g + _BW * b                            # (chunk, H, W)
        # Separable Sobel, cross-correlation form (matches nn.functional.conv2d):
        #   Gx = [1,2,1]^T (x) [1,0,-1],   Gy = [1,0,-1]^T (x) [1,2,1]
        # pltpu.roll(x, size-d, axis) supplies the "+d" stencil tap; wrapped
        # border rows/cols are zeroed by the spatial mask before accumulation.
        v = (gray
             + 2.0 * pltpu.roll(gray, H - 1, axis=1)
             + pltpu.roll(gray, H - 2, axis=1))
        gx = v - pltpu.roll(v, W - 2, axis=2)
        u = (gray
             + 2.0 * pltpu.roll(gray, W - 1, axis=2)
             + pltpu.roll(gray, W - 2, axis=2))
        gy = u - pltpu.roll(u, H - 2, axis=1)
        mag = jnp.sqrt(gx * gx + gy * gy) * weights
        return jnp.sum(mag, axis=0)                                   # (H, W)

    def chunk_body(c, carry):
        f_plane, r_plane = carry
        start = pl.multiple_of(c * chunk, chunk)
        if mask_images:
            img_idx = (base_img + start
                       + lax.broadcasted_iota(jnp.int32, (chunk, 1, 1), 0))
            w = spatial_w[None] * (img_idx < n_total).astype(jnp.float32)
        else:
            w = spatial_w[None]
        f_plane = f_plane + sobel_mag_sum(fake_ref[pl.ds(start, chunk)], w)
        r_plane = r_plane + sobel_mag_sum(real_ref[pl.ds(start, chunk)], w)
        return f_plane, r_plane

    zero = jnp.zeros((H, W), jnp.float32)
    num_chunks = block_imgs // chunk
    if num_chunks == 1:
        f_plane, r_plane = chunk_body(0, (zero, zero))
    else:
        f_plane, r_plane = lax.fori_loop(
            0, num_chunks, chunk_body, (zero, zero),
            unroll=min(num_chunks, _MAX_UNROLL))

    fsum_ref[...] = jnp.sum(f_plane, keepdims=True).reshape(1, 1, 1)
    rsum_ref[...] = jnp.sum(r_plane, keepdims=True).reshape(1, 1, 1)


def sharp_loss(fake_img, real_img):
    """|mean(|grad(gray(real))|) - mean(|grad(gray(fake))|)| for NCHW RGB."""
    assert fake_img.shape == real_img.shape, "fake/real shapes must match"
    N, C, H, W = fake_img.shape
    assert C == 3, "rgb_to_grayscale expects 3 channels"
    assert H >= 3 and W >= 3, "spatial dims must be >= 3 for a valid 3x3 conv"

    itemsize = max(fake_img.dtype.itemsize, real_img.dtype.itemsize)
    w_pad = _round_up(W, _LANE)
    h_pad = _round_up(H, _sublane_tile(itemsize))
    vmem_bytes_per_img = 3 * h_pad * w_pad * itemsize   # lane/sublane-padded VMEM bytes

    cap = _vmem_capacity_bytes()
    vmem_limit = (cap * 3) // 4                  # ~48 MiB on v7x, ~96 MiB on v5e/v6e
    input_budget = (14 << 20) if cap >= (96 << 20) else (5 << 20)  # per pipeline buffer

    # TODO(synk): for images too large for whole-image blocks (~1k x 1k f32 on
    # v7x) switch to row-strip tiling with a 2-row halo and per-strip sums.
    # TODO(synk): for W < 128, repack several images into the lane axis (with a
    # per-sub-width mask) to recover the ~128/W lost VPU/XLU lane utilization.
    block_raw = int(max(1, min(N, input_budget // vmem_bytes_per_img)))

    # Vectorized sub-chunk sized so live (chunk, H, W) f32 intermediates fit.
    per_img_interm = 8 * h_pad * w_pad * 4
    chunk = int(max(1, min(_MAX_CHUNK_IMGS, block_raw,
                           _CHUNK_SCRATCH_BUDGET // per_img_interm)))
    block_imgs = max(chunk, (block_raw // chunk) * chunk)  # multiple of chunk
    num_blocks = -(-N // block_imgs)
    mask_images = (N % block_imgs) != 0          # static: skip image mask when unneeded

    img_spec = pl.BlockSpec((block_imgs, 3, H, W), lambda i: (i, 0, 0, 0))
    sum_spec = pl.BlockSpec((1, 1, 1), lambda i: (i, 0, 0))

    kernel = functools.partial(
        _sharp_partial_kernel, n_total=N, block_imgs=block_imgs,
        chunk=chunk, mask_images=mask_images)

    fsum, rsum = pl.pallas_call(
        kernel,
        out_shape=(
            jax.ShapeDtypeStruct((num_blocks, 1, 1), jnp.float32),
            jax.ShapeDtypeStruct((num_blocks, 1, 1), jnp.float32),
        ),
        grid_spec=pltpu.PrefetchScalarGridSpec(
            num_scalar_prefetch=0,
            grid=(num_blocks,),
            in_specs=[img_spec, img_spec],
            out_specs=(sum_spec, sum_spec),
        ),
        compiler_params=pltpu.CompilerParams(
            dimension_semantics=("parallel",),
            vmem_limit_bytes=int(vmem_limit),
        ),
    )(fake_img, real_img)

    denom = jnp.float32(N * (H - 2) * (W - 2))   # valid conv output elements
    sharpness_fake = jnp.sum(fsum) / denom
    sharpness_real = jnp.sum(rsum) / denom
    return jnp.abs(sharpness_real - sharpness_fake)


def _sharp_loss_reference(fake_img, real_img):
    """Plain-JAX (XLA) reference matching the PyTorch module directly."""
    def sharpness(img):
        img = img.astype(jnp.float32)
        gray = _RW * img[:, 0] + _GW * img[:, 1] + _BW * img[:, 2]  # (N, H, W)
        H, W = gray.shape[1], gray.shape[2]

        def tap(di, dj):
            return gray[:, di:di + H - 2, dj:dj + W - 2]

        gx = ((tap(0, 0) - tap(0, 2)) + 2.0 * (tap(1, 0) - tap(1, 2))
              + (tap(2, 0) - tap(2, 2)))
        gy = ((tap(0, 0) - tap(2, 0)) + 2.0 * (tap(0, 1) - tap(2, 1))
              + (tap(0, 2) - tap(2, 2)))
        return jnp.mean(jnp.sqrt(gx * gx + gy * gy))

    return jnp.abs(sharpness(real_img) - sharpness(fake_img))


if __name__ == "__main__":
    key = jax.random.PRNGKey(0)
    kf, kr = jax.random.split(key)
    N, C, H, W = 2, 3, 16, 16
    fake_img = jax.random.uniform(kf, (N, C, H, W), dtype=jnp.float32)
    real_img = jax.random.uniform(kr, (N, C, H, W), dtype=jnp.float32)

    loss = jax.jit(sharp_loss)(fake_img, real_img)
    jax.block_until_ready(loss)

    ref = _sharp_loss_reference(fake_img, real_img)
    if not abs(float(loss) - float(ref)) < 1e-4:
        raise AssertionError(
            f"mismatch: pallas={float(loss):.6f} ref={float(ref):.6f}")
    print("KERNEL_OK")
</pallas_src>

<mosaic_0001>
module attributes {stable_mosaic.version = 11 : i64} {
  func.func @_sharp_partial_kernel(%arg0: i32, %arg1: memref<2x3x16x16xf32, #tpu.memory_space<vmem>>, %arg2: memref<2x3x16x16xf32, #tpu.memory_space<vmem>>, %arg3: memref<1x1x1xf32, #tpu.memory_space<vmem>>, %arg4: memref<1x1x1xf32, #tpu.memory_space<vmem>>) attributes {dimension_semantics = [#tpu.dimension_semantics<parallel>], iteration_bounds = array<i64: 1>, scalar_prefetch = 0 : i64, scratch_operands = 0 : i64, tpu.core_type = #tpu.core_type<tc>, window_params = [{transform_indices = @transform_0, window_bounds = array<i64: 2, 3, 16, 16>}, {transform_indices = @transform_1, window_bounds = array<i64: 2, 3, 16, 16>}, {transform_indices = @transform_2, window_bounds = array<i64: 1, 1, 1>}, {transform_indices = @transform_3, window_bounds = array<i64: 1, 1, 1>}]} {
    %0 = tpu.iota {dimensions = array<i32: 0>} : vector<16x16xi32>
    %1 = tpu.iota {dimensions = array<i32: 1>} : vector<16x16xi32>
    %c14_i32 = arith.constant 14 : i32
    %2 = vector.broadcast %c14_i32 : i32 to vector<16x16xi32>
    %3 = arith.cmpi slt, %0, %2 : vector<16x16xi32>
    %c14_i32_0 = arith.constant 14 : i32
    %4 = vector.broadcast %c14_i32_0 : i32 to vector<16x16xi32>
    %5 = arith.cmpi slt, %1, %4 : vector<16x16xi32>
    %6 = arith.andi %3, %5 : vector<16x16xi1>
    %7 = arith.extui %6 : vector<16x16xi1> to vector<16x16xi32>
    %8 = arith.sitofp %7 : vector<16x16xi32> to vector<16x16xf32>
    %cst = arith.constant 0.000000e+00 : f32
    %9 = vector.broadcast %cst : f32 to vector<16x16xf32>
    %c0_i32 = arith.constant 0 : i32
    %10 = tpu.assume_multiple %c0_i32, 2 : i32
    %11 = vector.shape_cast %8 : vector<16x16xf32> to vector<1x16x16xf32>
    %12 = arith.index_cast %10 : i32 to index
    %c0 = arith.constant 0 : index
    %c0_1 = arith.constant 0 : index
    %c0_2 = arith.constant 0 : index
    %13 = vector.load %arg1[%12, %c0, %c0_1, %c0_2] : memref<2x3x16x16xf32, #tpu.memory_space<vmem>>, vector<2x3x16x16xf32>
    %14 = vector.extract_strided_slice %13 {offsets = [0, 0, 0, 0], sizes = [2, 1, 16, 16], strides = [1, 1, 1, 1]} : vector<2x3x16x16xf32> to vector<2x1x16x16xf32>
    %15 = vector.shape_cast %14 : vector<2x1x16x16xf32> to vector<2x16x16xf32>
    %16 = vector.extract_strided_slice %13 {offsets = [0, 1, 0, 0], sizes = [2, 1, 16, 16], strides = [1, 1, 1, 1]} : vector<2x3x16x16xf32> to vector<2x1x16x16xf32>
    %17 = vector.shape_cast %16 : vector<2x1x16x16xf32> to vector<2x16x16xf32>
    %18 = vector.extract_strided_slice %13 {offsets = [0, 2, 0, 0], sizes = [2, 1, 16, 16], strides = [1, 1, 1, 1]} : vector<2x3x16x16xf32> to vector<2x1x16x16xf32>
    %19 = vector.shape_cast %18 : vector<2x1x16x16xf32> to vector<2x16x16xf32>
    %cst_3 = arith.constant 2.989000e-01 : f32
    %20 = vector.broadcast %cst_3 : f32 to vector<2x16x16xf32>
    %21 = arith.mulf %20, %15 : vector<2x16x16xf32>
    %cst_4 = arith.constant 5.870000e-01 : f32
    %22 = vector.broadcast %cst_4 : f32 to vector<2x16x16xf32>
    %23 = arith.mulf %22, %17 : vector<2x16x16xf32>
    %24 = arith.addf %21, %23 : vector<2x16x16xf32>
    %cst_5 = arith.constant 1.140000e-01 : f32
    %25 = vector.broadcast %cst_5 : f32 to vector<2x16x16xf32>
    %26 = arith.mulf %25, %19 : vector<2x16x16xf32>
    %27 = arith.addf %24, %26 : vector<2x16x16xf32>
    %c15_i32 = arith.constant 15 : i32
    %28 = tpu.dynamic_rotate %27 by %c15_i32 dim 1 : vector<2x16x16xf32>, i32 -> vector<2x16x16xf32>
    %cst_6 = arith.constant 2.000000e+00 : f32
    %29 = vector.broadcast %cst_6 : f32 to vector<2x16x16xf32>
    %30 = arith.mulf %29, %28 : vector<2x16x16xf32>
    %31 = arith.addf %27, %30 : vector<2x16x16xf32>
    %c14_i32_7 = arith.constant 14 : i32
    %32 = tpu.dynamic_rotate %27 by %c14_i32_7 dim 1 : vector<2x16x16xf32>, i32 -> vector<2x16x16xf32>
    %33 = arith.addf %31, %32 : vector<2x16x16xf32>
    %c14_i32_8 = arith.constant 14 : i32
    %34 = tpu.dynamic_rotate %33 by %c14_i32_8 dim 2 : vector<2x16x16xf32>, i32 -> vector<2x16x16xf32>
    %35 = arith.subf %33, %34 : vector<2x16x16xf32>
    %c15_i32_9 = arith.constant 15 : i32
    %36 = tpu.dynamic_rotate %27 by %c15_i32_9 dim 2 : vector<2x16x16xf32>, i32 -> vector<2x16x16xf32>
    %cst_10 = arith.constant 2.000000e+00 : f32
    %37 = vector.broadcast %cst_10 : f32 to vector<2x16x16xf32>
    %38 = arith.mulf %37, %36 : vector<2x16x16xf32>
    %39 = arith.addf %27, %38 : vector<2x16x16xf32>
    %c14_i32_11 = arith.constant 14 : i32
    %40 = tpu.dynamic_rotate %27 by %c14_i32_11 dim 2 : vector<2x16x16xf32>, i32 -> vector<2x16x16xf32>
    %41 = arith.addf %39, %40 : vector<2x16x16xf32>
    %c14_i32_12 = arith.constant 14 : i32
    %42 = tpu.dynamic_rotate %41 by %c14_i32_12 dim 1 : vector<2x16x16xf32>, i32 -> vector<2x16x16xf32>
    %43 = arith.subf %41, %42 : vector<2x16x16xf32>
    %44 = arith.mulf %35, %35 : vector<2x16x16xf32>
    %45 = arith.mulf %43, %43 : vector<2x16x16xf32>
    %46 = arith.addf %44, %45 : vector<2x16x16xf32>
    %47 = math.sqrt %46 : vector<2x16x16xf32>
    %48 = vector.broadcast %11 : vector<1x16x16xf32> to vector<2x16x16xf32>
    %49 = arith.mulf %47, %48 : vector<2x16x16xf32>
    %cst_13 = arith.constant dense<0.000000e+00> : vector<16x16xf32>
    %50 = vector.multi_reduction <add>, %49, %cst_13 [0] : vector<2x16x16xf32> to vector<16x16xf32>
    %51 = arith.addf %9, %50 : vector<16x16xf32>
    %52 = arith.index_cast %10 : i32 to index
    %c0_14 = arith.constant 0 : index
    %c0_15 = arith.constant 0 : index
    %c0_16 = arith.constant 0 : index
    %53 = vector.load %arg2[%52, %c0_14, %c0_15, %c0_16] : memref<2x3x16x16xf32, #tpu.memory_space<vmem>>, vector<2x3x16x16xf32>
    %54 = vector.extract_strided_slice %53 {offsets = [0, 0, 0, 0], sizes = [2, 1, 16, 16], strides = [1, 1, 1, 1]} : vector<2x3x16x16xf32> to vector<2x1x16x16xf32>
    %55 = vector.shape_cast %54 : vector<2x1x16x16xf32> to vector<2x16x16xf32>
    %56 = vector.extract_strided_slice %53 {offsets = [0, 1, 0, 0], sizes = [2, 1, 16, 16], strides = [1, 1, 1, 1]} : vector<2x3x16x16xf32> to vector<2x1x16x16xf32>
    %57 = vector.shape_cast %56 : vector<2x1x16x16xf32> to vector<2x16x16xf32>
    %58 = vector.extract_strided_slice %53 {offsets = [0, 2, 0, 0], sizes = [2, 1, 16, 16], strides = [1, 1, 1, 1]} : vector<2x3x16x16xf32> to vector<2x1x16x16xf32>
    %59 = vector.shape_cast %58 : vector<2x1x16x16xf32> to vector<2x16x16xf32>
    %cst_17 = arith.constant 2.989000e-01 : f32
    %60 = vector.broadcast %cst_17 : f32 to vector<2x16x16xf32>
    %61 = arith.mulf %60, %55 : vector<2x16x16xf32>
    %cst_18 = arith.constant 5.870000e-01 : f32
    %62 = vector.broadcast %cst_18 : f32 to vector<2x16x16xf32>
    %63 = arith.mulf %62, %57 : vector<2x16x16xf32>
    %64 = arith.addf %61, %63 : vector<2x16x16xf32>
    %cst_19 = arith.constant 1.140000e-01 : f32
    %65 = vector.broadcast %cst_19 : f32 to vector<2x16x16xf32>
    %66 = arith.mulf %65, %59 : vector<2x16x16xf32>
    %67 = arith.addf %64, %66 : vector<2x16x16xf32>
    %c15_i32_20 = arith.constant 15 : i32
    %68 = tpu.dynamic_rotate %67 by %c15_i32_20 dim 1 : vector<2x16x16xf32>, i32 -> vector<2x16x16xf32>
    %cst_21 = arith.constant 2.000000e+00 : f32
    %69 = vector.broadcast %cst_21 : f32 to vector<2x16x16xf32>
    %70 = arith.mulf %69, %68 : vector<2x16x16xf32>
    %71 = arith.addf %67, %70 : vector<2x16x16xf32>
    %c14_i32_22 = arith.constant 14 : i32
    %72 = tpu.dynamic_rotate %67 by %c14_i32_22 dim 1 : vector<2x16x16xf32>, i32 -> vector<2x16x16xf32>
    %73 = arith.addf %71, %72 : vector<2x16x16xf32>
    %c14_i32_23 = arith.constant 14 : i32
    %74 = tpu.dynamic_rotate %73 by %c14_i32_23 dim 2 : vector<2x16x16xf32>, i32 -> vector<2x16x16xf32>
    %75 = arith.subf %73, %74 : vector<2x16x16xf32>
    %c15_i32_24 = arith.constant 15 : i32
    %76 = tpu.dynamic_rotate %67 by %c15_i32_24 dim 2 : vector<2x16x16xf32>, i32 -> vector<2x16x16xf32>
    %cst_25 = arith.constant 2.000000e+00 : f32
    %77 = vector.broadcast %cst_25 : f32 to vector<2x16x16xf32>
    %78 = arith.mulf %77, %76 : vector<2x16x16xf32>
    %79 = arith.addf %67, %78 : vector<2x16x16xf32>
    %c14_i32_26 = arith.constant 14 : i32
    %80 = tpu.dynamic_rotate %67 by %c14_i32_26 dim 2 : vector<2x16x16xf32>, i32 -> vector<2x16x16xf32>
    %81 = arith.addf %79, %80 : vector<2x16x16xf32>
    %c14_i32_27 = arith.constant 14 : i32
    %82 = tpu.dynamic_rotate %81 by %c14_i32_27 dim 1 : vector<2x16x16xf32>, i32 -> vector<2x16x16xf32>
    %83 = arith.subf %81, %82 : vector<2x16x16xf32>
    %84 = arith.mulf %75, %75 : vector<2x16x16xf32>
    %85 = arith.mulf %83, %83 : vector<2x16x16xf32>
    %86 = arith.addf %84, %85 : vector<2x16x16xf32>
    %87 = math.sqrt %86 : vector<2x16x16xf32>
    %88 = vector.broadcast %11 : vector<1x16x16xf32> to vector<2x16x16xf32>
    %89 = arith.mulf %87, %88 : vector<2x16x16xf32>
    %cst_28 = arith.constant dense<0.000000e+00> : vector<16x16xf32>
    %90 = vector.multi_reduction <add>, %89, %cst_28 [0] : vector<2x16x16xf32> to vector<16x16xf32>
    %91 = arith.addf %9, %90 : vector<16x16xf32>
    %92 = vector.shape_cast %51 : vector<16x16xf32> to vector<1x16x16xf32>
    %cst_29 = arith.constant dense<0.000000e+00> : vector<1xf32>
    %93 = vector.multi_reduction <add>, %92, %cst_29 [1, 2] : vector<1x16x16xf32> to vector<1xf32>
    %94 = vector.shape_cast %93 : vector<1xf32> to vector<1x1x1xf32>
    %95 = vector.extract %94[0, 0, 0] : f32 from vector<1x1x1xf32>
    %96 = vector.broadcast %95 : f32 to vector<1x1xf32>
    %97 = vector.shape_cast %96 : vector<1x1xf32> to vector<1x1x1xf32>
    %c0_30 = arith.constant 0 : index
    %c0_31 = arith.constant 0 : index
    %c0_32 = arith.constant 0 : index
    %98 = vector.load %arg3[%c0_30, %c0_31, %c0_32] : memref<1x1x1xf32, #tpu.memory_space<vmem>>, vector<1x1x1xf32>
    tpu.vector_store %arg3[%c0_30, %c0_31, %c0_32], %97 {strides = array<i32>} : memref<1x1x1xf32, #tpu.memory_space<vmem>>, vector<1x1x1xf32>,
    %99 = vector.shape_cast %91 : vector<16x16xf32> to vector<1x16x16xf32>
    %cst_33 = arith.constant dense<0.000000e+00> : vector<1xf32>
    %100 = vector.multi_reduction <add>, %99, %cst_33 [1, 2] : vector<1x16x16xf32> to vector<1xf32>
    %101 = vector.shape_cast %100 : vector<1xf32> to vector<1x1x1xf32>
    %102 = vector.extract %101[0, 0, 0] : f32 from vector<1x1x1xf32>
    %103 = vector.broadcast %102 : f32 to vector<1x1xf32>
    %104 = vector.shape_cast %103 : vector<1x1xf32> to vector<1x1x1xf32>
    %c0_34 = arith.constant 0 : index
    %c0_35 = arith.constant 0 : index
    %c0_36 = arith.constant 0 : index
    %105 = vector.load %arg4[%c0_34, %c0_35, %c0_36] : memref<1x1x1xf32, #tpu.memory_space<vmem>>, vector<1x1x1xf32>
    tpu.vector_store %arg4[%c0_34, %c0_35, %c0_36], %104 {strides = array<i32>} : memref<1x1x1xf32, #tpu.memory_space<vmem>>, vector<1x1x1xf32>,
    return
  }
  func.func @transform_0(%arg0: i32) -> (i32, i32, i32, i32) {
    %c0_i32 = arith.constant 0 : i32
    %c0_i32_0 = arith.constant 0 : i32
    %c0_i32_1 = arith.constant 0 : i32
    %c0_i32_2 = arith.constant 0 : i32
    return %arg0, %c0_i32, %c0_i32_0, %c0_i32_1 : i32, i32, i32, i32
  }
  func.func @transform_1(%arg0: i32) -> (i32, i32, i32, i32) {
    %c0_i32 = arith.constant 0 : i32
    %c0_i32_0 = arith.constant 0 : i32
    %c0_i32_1 = arith.constant 0 : i32
    %c0_i32_2 = arith.constant 0 : i32
    return %arg0, %c0_i32, %c0_i32_0, %c0_i32_1 : i32, i32, i32, i32
  }
  func.func @transform_2(%arg0: i32) -> (i32, i32, i32) {
    %c0_i32 = arith.constant 0 : i32
    %c0_i32_0 = arith.constant 0 : i32
    %c0_i32_1 = arith.constant 0 : i32
    return %arg0, %c0_i32, %c0_i32_0 : i32, i32, i32
  }
  func.func @transform_3(%arg0: i32) -> (i32, i32, i32) {
    %c0_i32 = arith.constant 0 : i32
    %c0_i32_0 = arith.constant 0 : i32
    %c0_i32_1 = arith.constant 0 : i32
    return %arg0, %c0_i32, %c0_i32_0 : i32, i32, i32
  }
}

</mosaic_0001>

<llo_original>
// kernel: sharp_loss.1
$region0: #{sharp_loss.1}
  #allocation0 [shape = 'u32[]', space=smem, size = 0x4, offset = 0x4, fixed_abs, tag = 'smem constant byte address 0x4 - core index']
  #allocation1 [shape = 'u32[144,128]{1,0:T(1,128)}', space=vmem, size = 0x12000, scoped, tag = 'internal scratch']
  %s0 = inlined_call_operand.hbm [shape: f32[2,3,16,16], index: 0, kind: input, shape index: {}]
  %s1 = inlined_call_operand.hbm [shape: f32[2,3,16,16], index: 1, kind: input, shape index: {}]
  %s2 = inlined_call_operand.hbm [shape: f32[1,1,1], index: 2, kind: output, shape index: {0}]
  %s3 = inlined_call_operand.hbm [shape: f32[1,1,1], index: 3, kind: output, shape index: {1}]
  %4 = xla_tuple %s2, %s3
  %s5 = sld [smem:[#allocation0]]
  $region34: #{sharp_loss.1} parent=0
    _
  %s7 = ssub.s32 1, %s5
  %s8 = scalar_select 0, %s7, %s5
  $region1: #{sharp_loss.1} parent=0
    #allocation2 [shape = 'u8[49152]{0}', space=vmem, size = 0xc000, scoped, tag = 'input window, operand 0, single buffered']
    #allocation3 [shape = 's32[1]{0}', space=sflag, size = 0x4, scoped, tag = 'scoped memory for sharp_loss.1']
    #allocation4 [shape = 's32[1]{0}', space=sflag, size = 0x4, scoped, tag = 'scoped memory for sharp_loss.1']
    #allocation5 [shape = 'u8[49152]{0}', space=vmem, size = 0xc000, scoped, tag = 'input window, operand 1, single buffered']
    #allocation6 [shape = 's32[1]{0}', space=sflag, size = 0x4, scoped, tag = 'scoped memory for sharp_loss.1']
    #allocation7 [shape = 'u8[512]{0}', space=vmem, size = 0x400, scoped, tag = 'output window, operand 0, single buffered']
    #allocation8 [shape = 'u8[512]{0}', space=vmem, size = 0x400, scoped, tag = 'output window, operand 1, single buffered']
    #allocation9 [shape = 's32[1]{0}', space=sflag, size = 0x4, scoped, tag = 'scoped memory for sharp_loss.1']
    %9 = vsyncpa [#allocation3], 0
    %10 = vsyncpa [#allocation6], 0
    %11 = vsyncpa [#allocation4], 0
    %12 = vsyncpa [#allocation9], 0
    // Predicated region
    $region2: #{sharp_loss.1} parent=1 // pred_check
      _
    $region3: #{sharp_loss.1} parent=1 // pred_check_branch
      %14 = sbr.rel (0) target = $region5
    $region4: #{sharp_loss.1} parent=1 // pred_region
      %s16 = ssub.s32 1536, 1536
      %17 = vsyncadd [#allocation3], %s16
      %s18 = sshll.u32 [#allocation2], 4
      %s19 = int_to_ptr.vmem [resolvable:$true] %s18
      %24 = dma.hbm_to_vmem [thread:$0]  %s0, 1536, %s19, [#allocation3], 128, 128, 8
    $region5: #{sharp_loss.1} parent=1 // pred_fallthru
      _
    // Predicated region
    $region6: #{sharp_loss.1} parent=1 // pred_check
      _
    $region7: #{sharp_loss.1} parent=1 // pred_check_branch
      %26 = sbr.rel (0) target = $region9
    $region8: #{sharp_loss.1} parent=1 // pred_region
      %s28 = ssub.s32 1536, 1536
      %29 = vsyncadd [#allocation6], %s28
      %s30 = sshll.u32 [#allocation5], 4
      %s31 = int_to_ptr.vmem [resolvable:$true] %s30
      %36 = dma.hbm_to_vmem [thread:$0]  %s1, 1536, %s31, [#allocation6], 128, 128, 8
    $region9: #{sharp_loss.1} parent=1 // pred_fallthru
      _
    // Predicated region
    $region10: #{sharp_loss.1} parent=1 // pred_check
      _
    $region11: #{sharp_loss.1} parent=1 // pred_check_branch
      %38 = sbr.rel (0) target = $region13
    $region12: #{sharp_loss.1} parent=1 // pred_region
      %39 = dma.done [#allocation3], 1536
    $region13: #{sharp_loss.1} parent=1 // pred_fallthru
      _
    // Predicated region
    $region14: #{sharp_loss.1} parent=1 // pred_check
      _
    $region15: #{sharp_loss.1} parent=1 // pred_check_branch
      %41 = sbr.rel (0) target = $region17
    $region16: #{sharp_loss.1} parent=1 // pred_region
      %42 = dma.done [#allocation6], 1536
    $region17: #{sharp_loss.1} parent=1 // pred_fallthru
      _
    %v43 = vlaneseq
    %v44 = vshrl.u32 %v43, 7
    %v45 = vadd.s32 %v44, 8
    %v46 = vlaneseq
    %v47 = vand.u32 %v46, 127
    %vm48 = vcmp.lt.s32.totalorder %v44, 14
    %vm49 = vcmp.lt.s32.totalorder %v45, 14
    %vm50 = vcmp.lt.s32.totalorder %v47, 14
    %vm51 = vmand %vm48, %vm50
    %vm52 = vmand %vm49, %vm50
    %v53 = vsel %vm51, 1, 0
    %v54 = vsel %vm52, 1, 0
    %v55 = vcvt.s32.f32 %v53
    %v56 = vcvt.s32.f32 %v54
    %s57 = smul.u32 0, 48
    %s58 = scalar_lea.vmem [#allocation2], %s57
    %v59 = vld [vmem:[%s58] sm:$0xff]
    %v60 = vld [vmem:[%s58 + $0x8] sm:$0xff]
    %v61 = vld [vmem:[%s58 + $0x10] sm:$0xff]
    %v62 = vld [vmem:[%s58 + $0x18] sm:$0xff]
    %v63 = vld [vmem:[%s58 + $0x20] sm:$0xff]
    %v64 = vld [vmem:[%s58 + $0x28] sm:$0xff]
    %v65 = vld [vmem:[%s58 + $0x30] sm:$0xff]
    %v66 = vld [vmem:[%s58 + $0x38] sm:$0xff]
    %v67 = vld [vmem:[%s58 + $0x40] sm:$0xff]
    %v68 = vld [vmem:[%s58 + $0x48] sm:$0xff]
    %v69 = vld [vmem:[%s58 + $0x50] sm:$0xff]
    %v70 = vld [vmem:[%s58 + $0x58] sm:$0xff]
    %v71 = vmul.f32 %v59, 0.2989
    %v72 = vmul.f32 %v60, 0.2989
    %v73 = vmul.f32 %v65, 0.2989
    %v74 = vmul.f32 %v66, 0.2989
    %v75 = vmul.f32 %v61, 0.587
    %v76 = vmul.f32 %v62, 0.587
    %v77 = vmul.f32 %v67, 0.587
    %v78 = vmul.f32 %v68, 0.587
    %v79 = vadd.f32 %v71, %v75
    %v80 = vadd.f32 %v72, %v76
    %v81 = vadd.f32 %v73, %v77
    %v82 = vadd.f32 %v74, %v78
    %v83 = vmul.f32 %v63, 0.114
    %v84 = vmul.f32 %v64, 0.114
    %v85 = vmul.f32 %v69, 0.114
    %v86 = vmul.f32 %v70, 0.114
    %v87 = vadd.f32 %v79, %v83
    %v88 = vadd.f32 %v80, %v84
    %v89 = vadd.f32 %v81, %v85
    %v90 = vadd.f32 %v82, %v86
    %v91 = vrot.slane %v87, 1
    %v92 = vrot.slane %v89, 1
    %v93 = vrot.slane %v88, 1
    %v94 = vrot.slane %v90, 1
    %vm95 = vcmp.lt.s32.totalorder %v44, 7
    %v96 = vsel %vm95, %v91, %v93
    %v97 = vsel %vm95, %v92, %v94
    %v98 = vsel %vm95, %v93, %v91
    %v99 = vsel %vm95, %v94, %v92
    %v100 = vmul.f32 %v96, 2.0
    %v101 = vmul.f32 %v98, 2.0
    %v102 = vmul.f32 %v97, 2.0
    %v103 = vmul.f32 %v99, 2.0
    %v104 = vadd.f32 %v87, %v100
    %v105 = vadd.f32 %v88, %v101
    %v106 = vadd.f32 %v89, %v102
    %v107 = vadd.f32 %v90, %v103
    %v108 = vrot.slane %v87, 2
    %v109 = vrot.slane %v89, 2
    %v110 = vrot.slane %v88, 2
    %v111 = vrot.slane %v90, 2
    %vm112 = vcmp.lt.s32.totalorder %v44, 6
    %v113 = vsel %vm112, %v108, %v110
    %v114 = vsel %vm112, %v109, %v111
    %v115 = vsel %vm112, %v110, %v108
    %v116 = vsel %vm112, %v111, %v109
    %v117 = vadd.f32 %v104, %v113
    %v118 = vadd.f32 %v105, %v115
    %v119 = vadd.f32 %v106, %v114
    %v120 = vadd.f32 %v107, %v116
    %vm121 = vcmask 1047680
    %122 = vrot.lane.b32.xlu0 %v117, 16
    %v123 = vpop.permute.xlu0 %122
    %v124 = vsel %vm121, %v123, %v117
    %125 = vrot.lane.b32.xlu0 %v118, 16
    %v126 = vpop.permute.xlu0 %125
    %v127 = vsel %vm121, %v126, %v118
    %128 = vrot.lane.b32.xlu0 %v119, 16
    %v129 = vpop.permute.xlu0 %128
    %v130 = vsel %vm121, %v129, %v119
    %131 = vrot.lane.b32.xlu0 %v120, 16
    %v132 = vpop.permute.xlu0 %131
    %v133 = vsel %vm121, %v132, %v120
    %134 = vrot.lane.b32.xlu0 %v124, 16
    %v135 = vpop.permute.xlu0 %134
    %136 = vrot.lane.b32.xlu0 %v127, 16
    %v137 = vpop.permute.xlu0 %136
    %138 = vrot.lane.b32.xlu0 %v130, 16
    %v139 = vpop.permute.xlu0 %138
    %140 = vrot.lane.b32.xlu0 %v133, 16
    %v141 = vpop.permute.xlu0 %140
    %v142 = vsel %vm121, %v135, %v117
    %v143 = vsel %vm121, %v137, %v118
    %v144 = vsel %vm121, %v139, %v119
    %v145 = vsel %vm121, %v141, %v120
    %150 = vrot.lane.b32.xlu0 %v142, 126
    %v151 = vpop.permute.xlu0 %150
    %152 = vrot.lane.b32.xlu0 %v143, 126
    %v153 = vpop.permute.xlu0 %152
    %154 = vrot.lane.b32.xlu0 %v144, 126
    %v155 = vpop.permute.xlu0 %154
    %156 = vrot.lane.b32.xlu0 %v145, 126
    %v157 = vpop.permute.xlu0 %156
    %v162 = vsub.f32 %v117, %v151
    %v163 = vsub.f32 %v118, %v153
    %v164 = vsub.f32 %v119, %v155
    %v165 = vsub.f32 %v120, %v157
    %166 = vrot.lane.b32.xlu0 %v87, 16
    %v167 = vpop.permute.xlu0 %166
    %v168 = vsel %vm121, %v167, %v87
    %169 = vrot.lane.b32.xlu0 %v88, 16
    %v170 = vpop.permute.xlu0 %169
    %v171 = vsel %vm121, %v170, %v88
    %172 = vrot.lane.b32.xlu0 %v89, 16
    %v173 = vpop.permute.xlu0 %172
    %v174 = vsel %vm121, %v173, %v89
    %175 = vrot.lane.b32.xlu0 %v90, 16
    %v176 = vpop.permute.xlu0 %175
    %v177 = vsel %vm121, %v176, %v90
    %178 = vrot.lane.b32.xlu0 %v168, 16
    %v179 = vpop.permute.xlu0 %178
    %180 = vrot.lane.b32.xlu0 %v171, 16
    %v181 = vpop.permute.xlu0 %180
    %182 = vrot.lane.b32.xlu0 %v174, 16
    %v183 = vpop.permute.xlu0 %182
    %184 = vrot.lane.b32.xlu0 %v177, 16
    %v185 = vpop.permute.xlu0 %184
    %v186 = vsel %vm121, %v179, %v87
    %v187 = vsel %vm121, %v181, %v88
    %v188 = vsel %vm121, %v183, %v89
    %v189 = vsel %vm121, %v185, %v90
    %v190 = vmul.f32 %v186, 2.0
    %v191 = vmul.f32 %v187, 2.0
    %v192 = vmul.f32 %v188, 2.0
    %v193 = vmul.f32 %v189, 2.0
    %198 = vrot.lane.b32.xlu0 %v190, 127
    %v199 = vpop.permute.xlu0 %198
    %200 = vrot.lane.b32.xlu0 %v191, 127
    %v201 = vpop.permute.xlu0 %200
    %202 = vrot.lane.b32.xlu0 %v192, 127
    %v203 = vpop.permute.xlu0 %202
    %204 = vrot.lane.b32.xlu0 %v193, 127
    %v205 = vpop.permute.xlu0 %204
    %v210 = vadd.f32 %v87, %v199
    %v211 = vadd.f32 %v88, %v201
    %v212 = vadd.f32 %v89, %v203
    %v213 = vadd.f32 %v90, %v205
    %218 = vrot.lane.b32.xlu0 %v186, 126
    %v219 = vpop.permute.xlu0 %218
    %220 = vrot.lane.b32.xlu0 %v187, 126
    %v221 = vpop.permute.xlu0 %220
    %222 = vrot.lane.b32.xlu0 %v188, 126
    %v223 = vpop.permute.xlu0 %222
    %224 = vrot.lane.b32.xlu0 %v189, 126
    %v225 = vpop.permute.xlu0 %224
    %v230 = vadd.f32 %v210, %v219
    %v231 = vadd.f32 %v211, %v221
    %v232 = vadd.f32 %v212, %v223
    %v233 = vadd.f32 %v213, %v225
    %v234 = vrot.slane %v230, 2
    %v235 = vrot.slane %v232, 2
    %v236 = vrot.slane %v231, 2
    %v237 = vrot.slane %v233, 2
    %v238 = vsel %vm112, %v234, %v236
    %v239 = vsel %vm112, %v235, %v237
    %v240 = vsel %vm112, %v236, %v234
    %v241 = vsel %vm112, %v237, %v235
    %v242 = vsub.f32 %v230, %v238
    %v243 = vsub.f32 %v231, %v240
    %v244 = vsub.f32 %v232, %v239
    %v245 = vsub.f32 %v233, %v241
    %v246 = vmul.f32 %v162, %v162
    %v247 = vmul.f32 %v163, %v163
    %v248 = vmul.f32 %v164, %v164
    %v249 = vmul.f32 %v165, %v165
    %v250 = vmul.f32 %v242, %v242
    %v251 = vmul.f32 %v243, %v243
    %v252 = vmul.f32 %v244, %v244
    %v253 = vmul.f32 %v245, %v245
    %v254 = vadd.f32 %v246, %v250
    %v255 = vadd.f32 %v247, %v251
    %v256 = vadd.f32 %v248, %v252
    %v257 = vadd.f32 %v249, %v253
    %v258 = vrsqrt.pop %v254
    %v259 = vmul.f32 %v254, %v258
    %vm260 = vcmp.eq.f32.partialorder %v254, inf
    %v261 = vsel %vm260, %v254, %v259
    %vm262 = vcmp.eq.f32.partialorder %v254, 0.0
    %v263 = vand.u32 %v254, 2147483648
    %v264 = vsel %vm262, %v263, %v261
    %v265 = vrsqrt.pop %v255
    %v266 = vmul.f32 %v255, %v265
    %vm267 = vcmp.eq.f32.partialorder %v255, inf
    %v268 = vsel %vm267, %v255, %v266
    %vm269 = vcmp.eq.f32.partialorder %v255, 0.0
    %v270 = vand.u32 %v255, 2147483648
    %v271 = vsel %vm269, %v270, %v268
    %v272 = vrsqrt.pop %v256
    %v273 = vmul.f32 %v256, %v272
    %vm274 = vcmp.eq.f32.partialorder %v256, inf
    %v275 = vsel %vm274, %v256, %v273
    %vm276 = vcmp.eq.f32.partialorder %v256, 0.0
    %v277 = vand.u32 %v256, 2147483648
    %v278 = vsel %vm276, %v277, %v275
    %v279 = vrsqrt.pop %v257
    %v280 = vmul.f32 %v257, %v279
    %vm281 = vcmp.eq.f32.partialorder %v257, inf
    %v282 = vsel %vm281, %v257, %v280
    %vm283 = vcmp.eq.f32.partialorder %v257, 0.0
    %v284 = vand.u32 %v257, 2147483648
    %v285 = vsel %vm283, %v284, %v282
    %v286 = vmul.f32 %v264, %v55
    %v287 = vmul.f32 %v271, %v56
    %v288 = vmul.f32 %v278, %v55
    %v289 = vmul.f32 %v285, %v56
    %vm290 = vcmask 130048
    %v291 = vsel %vm290, %v286, 0.0
    %v292 = vsel %vm290, %v288, 0.0
    %v293 = vadd.f32 %v291, %v292
    %v294 = vsel %vm290, %v287, 0.0
    %v295 = vsel %vm290, %v289, 0.0
    %v296 = vadd.f32 %v294, %v295
    %v297 = vadd.f32 %v293, 0.0
    %v298 = vadd.f32 %v296, 0.0
    %s299 = scalar_lea.vmem [#allocation5], %s57
    %v300 = vld [vmem:[%s299] sm:$0xff]
    %v301 = vld [vmem:[%s299 + $0x8] sm:$0xff]
    %v302 = vld [vmem:[%s299 + $0x10] sm:$0xff]
    %v303 = vld [vmem:[%s299 + $0x18] sm:$0xff]
    %v304 = vld [vmem:[%s299 + $0x20] sm:$0xff]
    %v305 = vld [vmem:[%s299 + $0x28] sm:$0xff]
    %v306 = vld [vmem:[%s299 + $0x30] sm:$0xff]
    %v307 = vld [vmem:[%s299 + $0x38] sm:$0xff]
    %v308 = vld [vmem:[%s299 + $0x40] sm:$0xff]
    %v309 = vld [vmem:[%s299 + $0x48] sm:$0xff]
    %v310 = vld [vmem:[%s299 + $0x50] sm:$0xff]
    %v311 = vld [vmem:[%s299 + $0x58] sm:$0xff]
    %v312 = vmul.f32 %v300, 0.2989
    %v313 = vmul.f32 %v301, 0.2989
    %v314 = vmul.f32 %v306, 0.2989
    %v315 = vmul.f32 %v307, 0.2989
    %v316 = vmul.f32 %v302, 0.587
    %v317 = vmul.f32 %v303, 0.587
    %v318 = vmul.f32 %v308, 0.587
    %v319 = vmul.f32 %v309, 0.587
    %v320 = vadd.f32 %v312, %v316
    %v321 = vadd.f32 %v313, %v317
    %v322 = vadd.f32 %v314, %v318
    %v323 = vadd.f32 %v315, %v319
    %v324 = vmul.f32 %v304, 0.114
    %v325 = vmul.f32 %v305, 0.114
    %v326 = vmul.f32 %v310, 0.114
    %v327 = vmul.f32 %v311, 0.114
    %v328 = vadd.f32 %v320, %v324
    %v329 = vadd.f32 %v321, %v325
    %v330 = vadd.f32 %v322, %v326
    %v331 = vadd.f32 %v323, %v327
    %v332 = vrot.slane %v328, 1
    %v333 = vrot.slane %v330, 1
    %v334 = vrot.slane %v329, 1
    %v335 = vrot.slane %v331, 1
    %v336 = vsel %vm95, %v332, %v334
    %v337 = vsel %vm95, %v333, %v335
    %v338 = vsel %vm95, %v334, %v332
    %v339 = vsel %vm95, %v335, %v333
    %v340 = vmul.f32 %v336, 2.0
    %v341 = vmul.f32 %v338, 2.0
    %v342 = vmul.f32 %v337, 2.0
    %v343 = vmul.f32 %v339, 2.0
    %v344 = vadd.f32 %v328, %v340
    %v345 = vadd.f32 %v329, %v341
    %v346 = vadd.f32 %v330, %v342
    %v347 = vadd.f32 %v331, %v343
    %v348 = vrot.slane %v328, 2
    %v349 = vrot.slane %v330, 2
    %v350 = vrot.slane %v329, 2
    %v351 = vrot.slane %v331, 2
    %v352 = vsel %vm112, %v348, %v350
    %v353 = vsel %vm112, %v349, %v351
    %v354 = vsel %vm112, %v350, %v348
    %v355 = vsel %vm112, %v351, %v349
    %v356 = vadd.f32 %v344, %v352
    %v357 = vadd.f32 %v345, %v354
    %v358 = vadd.f32 %v346, %v353
    %v359 = vadd.f32 %v347, %v355
    %360 = vrot.lane.b32.xlu0 %v356, 16
    %v361 = vpop.permute.xlu0 %360
    %v362 = vsel %vm121, %v361, %v356
    %363 = vrot.lane.b32.xlu0 %v357, 16
    %v364 = vpop.permute.xlu0 %363
    %v365 = vsel %vm121, %v364, %v357
    %366 = vrot.lane.b32.xlu0 %v358, 16
    %v367 = vpop.permute.xlu0 %366
    %v368 = vsel %vm121, %v367, %v358
    %369 = vrot.lane.b32.xlu0 %v359, 16
    %v370 = vpop.permute.xlu0 %369
    %v371 = vsel %vm121, %v370, %v359
    %372 = vrot.lane.b32.xlu0 %v362, 16
    %v373 = vpop.permute.xlu0 %372
    %374 = vrot.lane.b32.xlu0 %v365, 16
    %v375 = vpop.permute.xlu0 %374
    %376 = vrot.lane.b32.xlu0 %v368, 16
    %v377 = vpop.permute.xlu0 %376
    %378 = vrot.lane.b32.xlu0 %v371, 16
    %v379 = vpop.permute.xlu0 %378
    %v380 = vsel %vm121, %v373, %v356
    %v381 = vsel %vm121, %v375, %v357
    %v382 = vsel %vm121, %v377, %v358
    %v383 = vsel %vm121, %v379, %v359
    %388 = vrot.lane.b32.xlu0 %v380, 126
    %v389 = vpop.permute.xlu0 %388
    %390 = vrot.lane.b32.xlu0 %v381, 126
    %v391 = vpop.permute.xlu0 %390
    %392 = vrot.lane.b32.xlu0 %v382, 126
    %v393 = vpop.permute.xlu0 %392
    %394 = vrot.lane.b32.xlu0 %v383, 126
    %v395 = vpop.permute.xlu0 %394
    %v400 = vsub.f32 %v356, %v389
    %v401 = vsub.f32 %v357, %v391
    %v402 = vsub.f32 %v358, %v393
    %v403 = vsub.f32 %v359, %v395
    %404 = vrot.lane.b32.xlu0 %v328, 16
    %v405 = vpop.permute.xlu0 %404
    %v406 = vsel %vm121, %v405, %v328
    %407 = vrot.lane.b32.xlu0 %v329, 16
    %v408 = vpop.permute.xlu0 %407
    %v409 = vsel %vm121, %v408, %v329
    %410 = vrot.lane.b32.xlu0 %v330, 16
    %v411 = vpop.permute.xlu0 %410
    %v412 = vsel %vm121, %v411, %v330
    %413 = vrot.lane.b32.xlu0 %v331, 16
    %v414 = vpop.permute.xlu0 %413
    %v415 = vsel %vm121, %v414, %v331
    %416 = vrot.lane.b32.xlu0 %v406, 16
    %v417 = vpop.permute.xlu0 %416
    %418 = vrot.lane.b32.xlu0 %v409, 16
    %v419 = vpop.permute.xlu0 %418
    %420 = vrot.lane.b32.xlu0 %v412, 16
    %v421 = vpop.permute.xlu0 %420
    %422 = vrot.lane.b32.xlu0 %v415, 16
    %v423 = vpop.permute.xlu0 %422
    %v424 = vsel %vm121, %v417, %v328
    %v425 = vsel %vm121, %v419, %v329
    %v426 = vsel %vm121, %v421, %v330
    %v427 = vsel %vm121, %v423, %v331
    %v428 = vmul.f32 %v424, 2.0
    %v429 = vmul.f32 %v425, 2.0
    %v430 = vmul.f32 %v426, 2.0
    %v431 = vmul.f32 %v427, 2.0
    %436 = vrot.lane.b32.xlu0 %v428, 127
    %v437 = vpop.permute.xlu0 %436
    %438 = vrot.lane.b32.xlu0 %v429, 127
    %v439 = vpop.permute.xlu0 %438
    %440 = vrot.lane.b32.xlu0 %v430, 127
    %v441 = vpop.permute.xlu0 %440
    %442 = vrot.lane.b32.xlu0 %v431, 127
    %v443 = vpop.permute.xlu0 %442
    %v448 = vadd.f32 %v328, %v437
    %v449 = vadd.f32 %v329, %v439
    %v450 = vadd.f32 %v330, %v441
    %v451 = vadd.f32 %v331, %v443
    %456 = vrot.lane.b32.xlu0 %v424, 126
    %v457 = vpop.permute.xlu0 %456
    %458 = vrot.lane.b32.xlu0 %v425, 126
    %v459 = vpop.permute.xlu0 %458
    %460 = vrot.lane.b32.xlu0 %v426, 126
    %v461 = vpop.permute.xlu0 %460
    %462 = vrot.lane.b32.xlu0 %v427, 126
    %v463 = vpop.permute.xlu0 %462
    %v468 = vadd.f32 %v448, %v457
    %v469 = vadd.f32 %v449, %v459
    %v470 = vadd.f32 %v450, %v461
    %v471 = vadd.f32 %v451, %v463
    %v472 = vrot.slane %v468, 2
    %v473 = vrot.slane %v470, 2
    %v474 = vrot.slane %v469, 2
    %v475 = vrot.slane %v471, 2
    %v476 = vsel %vm112, %v472, %v474
    %v477 = vsel %vm112, %v473, %v475
    %v478 = vsel %vm112, %v474, %v472
    %v479 = vsel %vm112, %v475, %v473
    %v480 = vsub.f32 %v468, %v476
    %v481 = vsub.f32 %v469, %v478
    %v482 = vsub.f32 %v470, %v477
    %v483 = vsub.f32 %v471, %v479
    %v484 = vmul.f32 %v400, %v400
    %v485 = vmul.f32 %v401, %v401
    %v486 = vmul.f32 %v402, %v402
    %v487 = vmul.f32 %v403, %v403
    %v488 = vmul.f32 %v480, %v480
    %v489 = vmul.f32 %v481, %v481
    %v490 = vmul.f32 %v482, %v482
    %v491 = vmul.f32 %v483, %v483
    %v492 = vadd.f32 %v484, %v488
    %v493 = vadd.f32 %v485, %v489
    %v494 = vadd.f32 %v486, %v490
    %v495 = vadd.f32 %v487, %v491
    %v496 = vrsqrt.pop %v492
    %v497 = vmul.f32 %v492, %v496
    %vm498 = vcmp.eq.f32.partialorder %v492, inf
    %v499 = vsel %vm498, %v492, %v497
    %vm500 = vcmp.eq.f32.partialorder %v492, 0.0
    %v501 = vand.u32 %v492, 2147483648
    %v502 = vsel %vm500, %v501, %v499
    %v503 = vrsqrt.pop %v493
    %v504 = vmul.f32 %v493, %v503
    %vm505 = vcmp.eq.f32.partialorder %v493, inf
    %v506 = vsel %vm505, %v493, %v504
    %vm507 = vcmp.eq.f32.partialorder %v493, 0.0
    %v508 = vand.u32 %v493, 2147483648
    %v509 = vsel %vm507, %v508, %v506
    %v510 = vrsqrt.pop %v494
    %v511 = vmul.f32 %v494, %v510
    %vm512 = vcmp.eq.f32.partialorder %v494, inf
    %v513 = vsel %vm512, %v494, %v511
    %vm514 = vcmp.eq.f32.partialorder %v494, 0.0
    %v515 = vand.u32 %v494, 2147483648
    %v516 = vsel %vm514, %v515, %v513
    %v517 = vrsqrt.pop %v495
    %v518 = vmul.f32 %v495, %v517
    %vm519 = vcmp.eq.f32.partialorder %v495, inf
    %v520 = vsel %vm519, %v495, %v518
    %vm521 = vcmp.eq.f32.partialorder %v495, 0.0
    %v522 = vand.u32 %v495, 2147483648
    %v523 = vsel %vm521, %v522, %v520
    %v524 = vmul.f32 %v502, %v55
    %v525 = vmul.f32 %v509, %v56
    %v526 = vmul.f32 %v516, %v55
    %v527 = vmul.f32 %v523, %v56
    %v528 = vsel %vm290, %v524, 0.0
    %v529 = vsel %vm290, %v526, 0.0
    %v530 = vadd.f32 %v528, %v529
    %v531 = vsel %vm290, %v525, 0.0
    %v532 = vsel %vm290, %v527, 0.0
    %v533 = vadd.f32 %v531, %v532
    %v534 = vadd.f32 %v530, 0.0
    %v535 = vadd.f32 %v533, 0.0
    %v536 = vsel %vm290, %v297, 0.0
    %v537 = vsel %vm290, %v298, 0.0
    %v538 = vadd.f32 %v536, %v537
    %539 = vadd.xlane.f32.xlu0 %v538
    %v540 = vpop.xlane.xlu0 %539
    %v541 = vrot.slane %v540, 4
    %v542 = vadd.f32 %v540, %v541
    %v543 = vrot.slane %v542, 2
    %v544 = vadd.f32 %v542, %v543
    %v545 = vrot.slane %v544, 1
    %v546 = vadd.f32 %v544, %v545
    %s547 = vtos %v546
    %v548 = vstv %s547
    %vm549 = vcmask 0
    %550 = vst.msk [vmem:[#allocation7] sm:$0x1] %vm549, %v548
    %v551 = vsel %vm290, %v534, 0.0
    %v552 = vsel %vm290, %v535, 0.0
    %v553 = vadd.f32 %v551, %v552
    %554 = vadd.xlane.f32.xlu0 %v553
    %v555 = vpop.xlane.xlu0 %554
    %v556 = vrot.slane %v555, 4
    %v557 = vadd.f32 %v555, %v556
    %v558 = vrot.slane %v557, 2
    %v559 = vadd.f32 %v557, %v558
    %v560 = vrot.slane %v559, 1
    %v561 = vadd.f32 %v559, %v560
    %s562 = vtos %v561
    %v563 = vstv %s562
    %564 = vst.msk [vmem:[#allocation8] sm:$0x1] %vm549, %v563
    // Predicated region
    $region18: #{sharp_loss.1} parent=1 // pred_check
      _
    $region19: #{sharp_loss.1} parent=1 // pred_check_branch
      %566 = sbr.rel (0) target = $region21
    $region20: #{sharp_loss.1} parent=1 // pred_region
      %s568 = ssub.s32 16, 16
      %569 = vsyncadd [#allocation4], %s568
      %s571 = sshll.u32 [#allocation7], 4
      %s572 = int_to_ptr.vmem [resolvable:$true] %s571
      %574 = dma.vmem_to_hbm [thread:$0]  %s572, 16, %s2, [#allocation4]
    $region21: #{sharp_loss.1} parent=1 // pred_fallthru
      _
    // Predicated region
    $region22: #{sharp_loss.1} parent=1 // pred_check
      _
    $region23: #{sharp_loss.1} parent=1 // pred_check_branch
      %576 = sbr.rel (0) target = $region25
    $region24: #{sharp_loss.1} parent=1 // pred_region
      %s578 = ssub.s32 16, 16
      %579 = vsyncadd [#allocation9], %s578
      %s581 = sshll.u32 [#allocation8], 4
      %s582 = int_to_ptr.vmem [resolvable:$true] %s581
      %584 = dma.vmem_to_hbm [thread:$0]  %s582, 16, %s3, [#allocation9]
    $region25: #{sharp_loss.1} parent=1 // pred_fallthru
      _
    // Predicated region
    $region26: #{sharp_loss.1} parent=1 // pred_check
      _
    $region27: #{sharp_loss.1} parent=1 // pred_check_branch
      %586 = sbr.rel (0) target = $region29
    $region28: #{sharp_loss.1} parent=1 // pred_region
      %587 = dma.done [#allocation4], 16
    $region29: #{sharp_loss.1} parent=1 // pred_fallthru
      _
    // Predicated region
    $region30: #{sharp_loss.1} parent=1 // pred_check
      _
    $region31: #{sharp_loss.1} parent=1 // pred_check_branch
      %589 = sbr.rel (0) target = $region33
    $region32: #{sharp_loss.1} parent=1 // pred_region
      %590 = dma.done [#allocation9], 16
    $region33: #{sharp_loss.1} parent=1 // pred_fallthru
      _
    %591 = vsyncpa [#allocation3], 1
    %592 = vsyncpa [#allocation6], 1
    %593 = vsyncpa [#allocation4], 1
    %594 = vsyncpa [#allocation9], 1

</llo_original>
